<compile_context>
chip_gen: v7x
topology: tpu7x:2x2x1
jax: 0.10.0
libtpu: 0.0.40
codegen_flags: <defaults>
</compile_context>

<pallas_src>
import functools

import jax
import jax.numpy as jnp
from jax.experimental import pallas as pl
from jax.experimental.pallas import tpu as pltpu


def _classifier_kernel(text_ref, image_ref, w_ref, b_ref, labels_ref,
                       logits_ref, loss_ref, *, true_b):
    i = pl.program_id(0)

    # Add in the embeddings' native dtype (bf16-friendly); MXU matmul with
    # f32 accumulation.  Compute is trivially hidden under the DMA shadow.
    combined = text_ref[...] + image_ref[...]                        # (TB, D)
    logits = jnp.dot(combined, w_ref[...],
                     preferred_element_type=jnp.float32)             # (TB, C) f32
    logits = logits + b_ref[...].astype(jnp.float32)
    logits_ref[...] = logits.astype(logits_ref.dtype)

    # Cross-entropy (numerically stable logsumexp), f32 throughout.
    tb, c = logits.shape
    m = jnp.max(logits, axis=-1, keepdims=True)                      # (TB, 1)
    lse = m + jnp.log(jnp.sum(jnp.exp(logits - m), axis=-1, keepdims=True))
    class_iota = jax.lax.broadcasted_iota(jnp.int32, (tb, c), 1)     # (TB, C)
    onehot = (class_iota == labels_ref[...]).astype(jnp.float32)     # (TB, C)
    correct = jnp.sum(logits * onehot, axis=-1, keepdims=True)       # (TB, 1)

    # Rows past the true batch (partial last block) hold undefined data;
    # use a where-guard (not a multiply) so garbage inf/NaN cannot leak in.
    row_ids = i * tb + jax.lax.broadcasted_iota(jnp.int32, (tb, 1), 0)
    valid = row_ids < true_b                                         # (TB, 1) bool
    partial = jnp.sum(jnp.where(valid, lse - correct, 0.0))          # scalar

    # Lane-dense per-tile partial (full unmasked vst of one vreg tile).
    loss_ref[...] = jnp.broadcast_to(partial, (8, 128)).astype(jnp.float32)


def _round_up(x, m):
    return ((x + m - 1) // m) * m


def _pick_batch_tile(B, D, C, emb_itemsize, batch_tile):
    """Tile rows so 2 inputs x 2 double-buffers (+ labels/logits bufs) fit
    comfortably inside even v5e's 16 MiB default scoped VMEM, with >= 2 grid
    steps for large batches (v7x megacore)."""
    vmem_budget = 12 << 20
    per_row = (2 * 2 * D * emb_itemsize    # text + image, double-buffered
               + 2 * 4                     # labels column, double-buffered
               + 2 * C * 4)                # f32 logits tile, double-buffered
    tb_vmem_cap = max(16, (vmem_budget // per_row) // 16 * 16)
    tb_cap = max(8, min(batch_tile, tb_vmem_cap))

    if B <= 256:
        if B <= tb_cap:
            return B                       # single tile; block == full batch dim
        return max(8, (tb_cap // 8) * 8)   # small multi-tile path
    # Large batch: guarantee >= 2 grid steps so both v7x TensorCores work.
    tb = min(tb_cap, _round_up(pl.cdiv(B, 2), 16))
    return max(16, (tb // 16) * 16)


def model_for_classification(text_embeds, image_embeds, weight, bias, labels,
                             *, batch_tile=2048):
    """weight: (C, D) as stored by nn.Linear; bias: (C,); labels: (B,) int."""
    B, D = text_embeds.shape
    C = weight.shape[0]
    emb_dtype = text_embeds.dtype
    itemsize = jnp.dtype(emb_dtype).itemsize

    TB = _pick_batch_tile(B, D, C, itemsize, batch_tile)
    nt = pl.cdiv(B, TB)

    image_embeds = image_embeds.astype(emb_dtype)      # keep native dtype
    w_t = weight.T.astype(emb_dtype)                    # (D, C) tiny, resident
    b2d = bias.reshape(1, C).astype(jnp.float32)        # (1, C)
    labels2d = labels.reshape(B, 1).astype(jnp.int32)   # (B, 1)

    # Explicit scoped-VMEM limit (covers double-buffered tiles + residents).
    vmem_need = (2 * 2 * TB * D * itemsize + 2 * TB * C * 4 + 2 * TB * 4
                 + D * C * itemsize + C * 4 + 2 * 8 * 128 * 4)
    vmem_limit = int(min(max(int(1.5 * vmem_need) + (2 << 20), 4 << 20),
                         48 << 20))

    cost = pl.CostEstimate(
        flops=2 * B * D * C,
        transcendentals=B * (C + 1),
        bytes_accessed=(2 * B * D * itemsize + D * C * itemsize
                        + B * C * 4 + B * 4 + nt * 8 * 128 * 4),
    )

    logits, loss_parts = pl.pallas_call(
        functools.partial(_classifier_kernel, true_b=B),
        out_shape=(jax.ShapeDtypeStruct((B, C), jnp.float32),
                   jax.ShapeDtypeStruct((nt * 8, 128), jnp.float32)),
        grid=(nt,),
        in_specs=[
            pl.BlockSpec((TB, D), lambda i: (i, 0)),   # text_embeds tile
            pl.BlockSpec((TB, D), lambda i: (i, 0)),   # image_embeds tile
            pl.BlockSpec((D, C), lambda i: (0, 0)),    # W^T (resident)
            pl.BlockSpec((1, C), lambda i: (0, 0)),    # bias (resident)
            pl.BlockSpec((TB, 1), lambda i: (i, 0)),   # labels tile
        ],
        out_specs=(
            pl.BlockSpec((TB, C), lambda i: (i, 0)),   # logits tile
            pl.BlockSpec((8, 128), lambda i: (i, 0)),  # per-tile loss partial
        ),
        compiler_params=pltpu.CompilerParams(
            dimension_semantics=("parallel",),          # megacore on v7x
            vmem_limit_bytes=vmem_limit),
        cost_estimate=cost,
    )(text_embeds, image_embeds, w_t, b2d, labels2d)

    loss = jnp.sum(loss_parts.reshape(nt, 8, 128)[:, 0, 0]) / B
    return logits, loss


def _reference(text_embeds, image_embeds, weight, bias, labels):
    # Same precision recipe as the kernel: native-dtype add + bf16 MXU matmul
    # with f32 accumulation, f32 cross-entropy.
    combined = text_embeds + image_embeds
    logits = jnp.dot(combined, weight.T.astype(combined.dtype),
                     preferred_element_type=jnp.float32)
    logits = logits + bias.astype(jnp.float32)
    logZ = jax.scipy.special.logsumexp(logits, axis=-1)
    correct = jnp.take_along_axis(logits, labels[:, None], axis=-1)[:, 0]
    return logits, jnp.mean(logZ - correct)


def _check(logits, loss, ref_logits, ref_loss):
    assert jnp.allclose(logits, ref_logits, atol=2e-3, rtol=2e-3)
    assert jnp.allclose(loss, ref_loss, atol=2e-3, rtol=2e-3)


if __name__ == "__main__":
    key = jax.random.PRNGKey(0)
    k_txt, k_img, k_w, k_b, k_lab = jax.random.split(key, 5)

    # --- Case 1: tiny batch (single tile), bf16 embeddings ----------------
    B, D, C = 2, 32, 2
    text_embeds = jax.random.normal(k_txt, (B, D), jnp.float32).astype(jnp.bfloat16)
    image_embeds = jax.random.normal(k_img, (B, D), jnp.float32).astype(jnp.bfloat16)
    weight = jax.random.normal(k_w, (C, D), jnp.float32) * 0.05
    bias = jax.random.normal(k_b, (C,), jnp.float32) * 0.01
    labels = jax.random.randint(k_lab, (B,), 0, C, dtype=jnp.int32)

    logits, loss = model_for_classification(
        text_embeds, image_embeds, weight, bias, labels)
    jax.block_until_ready((logits, loss))
    _check(logits, loss,
           *_reference(text_embeds, image_embeds, weight, bias, labels))

    # --- Case 2: multi-tile + ragged batch (partial last block, no pad) ---
    B2 = 20
    k2_txt, k2_img, k2_lab = jax.random.split(jax.random.PRNGKey(1), 3)
    text2 = jax.random.normal(k2_txt, (B2, D), jnp.float32).astype(jnp.bfloat16)
    image2 = jax.random.normal(k2_img, (B2, D), jnp.float32).astype(jnp.bfloat16)
    labels2 = jax.random.randint(k2_lab, (B2,), 0, C, dtype=jnp.int32)

    logits2, loss2 = model_for_classification(
        text2, image2, weight, bias, labels2, batch_tile=8)
    jax.block_until_ready((logits2, loss2))
    _check(logits2, loss2,
           *_reference(text2, image2, weight, bias, labels2))

    # --- Case 3: larger batch -> >=2 grid steps (megacore path) -----------
    B3, D3 = 300, 64
    k3_txt, k3_img, k3_w, k3_b, k3_lab = jax.random.split(jax.random.PRNGKey(2), 5)
    text3 = jax.random.normal(k3_txt, (B3, D3), jnp.float32).astype(jnp.bfloat16)
    image3 = jax.random.normal(k3_img, (B3, D3), jnp.float32).astype(jnp.bfloat16)
    weight3 = jax.random.normal(k3_w, (C, D3), jnp.float32) * 0.05
    bias3 = jax.random.normal(k3_b, (C,), jnp.float32) * 0.01
    labels3 = jax.random.randint(k3_lab, (B3,), 0, C, dtype=jnp.int32)

    logits3, loss3 = model_for_classification(
        text3, image3, weight3, bias3, labels3)
    jax.block_until_ready((logits3, loss3))
    _check(logits3, loss3,
           *_reference(text3, image3, weight3, bias3, labels3))

    print("KERNEL_OK")
</pallas_src>

<mosaic_0001>
module attributes {stable_mosaic.version = 11 : i64} {
  func.func @_classifier_kernel(%arg0: i32, %arg1: memref<2x32xbf16, #tpu.memory_space<vmem>>, %arg2: memref<2x32xbf16, #tpu.memory_space<vmem>>, %arg3: memref<32x2xbf16, #tpu.memory_space<vmem>>, %arg4: memref<1x2xf32, #tpu.memory_space<vmem>>, %arg5: memref<2x1xi32, #tpu.memory_space<vmem>>, %arg6: memref<2x2xf32, #tpu.memory_space<vmem>>, %arg7: memref<8x128xf32, #tpu.memory_space<vmem>>) attributes {dimension_semantics = [#tpu.dimension_semantics<parallel>], iteration_bounds = array<i64: 1>, scalar_prefetch = 0 : i64, scratch_operands = 0 : i64, tpu.core_type = #tpu.core_type<tc>, window_params = [{transform_indices = @transform_0, window_bounds = array<i64: 2, 32>}, {transform_indices = @transform_1, window_bounds = array<i64: 2, 32>}, {pipeline_mode = #tpu.pipeline_mode<synchronous>, transform_indices = @transform_2, window_bounds = array<i64: 32, 2>}, {pipeline_mode = #tpu.pipeline_mode<synchronous>, transform_indices = @transform_3, window_bounds = array<i64: 1, 2>}, {transform_indices = @transform_4, window_bounds = array<i64: 2, 1>}, {transform_indices = @transform_5, window_bounds = array<i64: 2, 2>}, {transform_indices = @transform_6, window_bounds = array<i64: 8, 128>}]} {
    %c0 = arith.constant 0 : index
    %c0_0 = arith.constant 0 : index
    %0 = vector.load %arg1[%c0, %c0_0] : memref<2x32xbf16, #tpu.memory_space<vmem>>, vector<2x32xbf16>
    %c0_1 = arith.constant 0 : index
    %c0_2 = arith.constant 0 : index
    %1 = vector.load %arg2[%c0_1, %c0_2] : memref<2x32xbf16, #tpu.memory_space<vmem>>, vector<2x32xbf16>
    %2 = arith.addf %0, %1 : vector<2x32xbf16>
    %c0_3 = arith.constant 0 : index
    %c0_4 = arith.constant 0 : index
    %3 = vector.load %arg3[%c0_3, %c0_4] : memref<32x2xbf16, #tpu.memory_space<vmem>>, vector<32x2xbf16>
    %cst = arith.constant dense<0.000000e+00> : vector<2x2xf32>
    %4 = tpu.matmul %2, %3, %cst {dimension_numbers = #tpu.dot_dimension_numbers<[1], [0], [0], [1], [0, 0, 1, 1], [], []>} : vector<2x32xbf16>, vector<32x2xbf16>, vector<2x2xf32> -> vector<2x2xf32>
    %c0_5 = arith.constant 0 : index
    %c0_6 = arith.constant 0 : index
    %5 = vector.load %arg4[%c0_5, %c0_6] : memref<1x2xf32, #tpu.memory_space<vmem>>, vector<1x2xf32>
    %6 = vector.broadcast %5 : vector<1x2xf32> to vector<2x2xf32>
    %7 = arith.addf %4, %6 : vector<2x2xf32>
    %c0_7 = arith.constant 0 : index
    %c0_8 = arith.constant 0 : index
    %8 = vector.load %arg6[%c0_7, %c0_8] : memref<2x2xf32, #tpu.memory_space<vmem>>, vector<2x2xf32>
    tpu.vector_store %arg6[%c0_7, %c0_8], %7 {strides = array<i32>} : memref<2x2xf32, #tpu.memory_space<vmem>>, vector<2x2xf32>,
    %cst_9 = arith.constant dense<0xFF800000> : vector<2xf32>
    %9 = vector.multi_reduction <maximumf>, %7, %cst_9 [1] : vector<2x2xf32> to vector<2xf32>
    %10 = vector.shape_cast %9 : vector<2xf32> to vector<2x1xf32>
    %11 = vector.broadcast %10 : vector<2x1xf32> to vector<2x2xf32>
    %12 = arith.subf %7, %11 : vector<2x2xf32>
    %13 = math.exp %12 : vector<2x2xf32>
    %cst_10 = arith.constant dense<0.000000e+00> : vector<2xf32>
    %14 = vector.multi_reduction <add>, %13, %cst_10 [1] : vector<2x2xf32> to vector<2xf32>
    %15 = vector.shape_cast %14 : vector<2xf32> to vector<2x1xf32>
    %16 = math.log %15 : vector<2x1xf32>
    %17 = arith.addf %10, %16 : vector<2x1xf32>
    %18 = tpu.iota {dimensions = array<i32: 1>} : vector<2x2xi32>
    %c0_11 = arith.constant 0 : index
    %c0_12 = arith.constant 0 : index
    %19 = vector.load %arg5[%c0_11, %c0_12] : memref<2x1xi32, #tpu.memory_space<vmem>>, vector<2x1xi32>
    %20 = vector.broadcast %19 : vector<2x1xi32> to vector<2x2xi32>
    %21 = arith.cmpi eq, %18, %20 : vector<2x2xi32>
    %22 = arith.extui %21 : vector<2x2xi1> to vector<2x2xi32>
    %23 = arith.sitofp %22 : vector<2x2xi32> to vector<2x2xf32>
    %24 = arith.mulf %7, %23 : vector<2x2xf32>
    %cst_13 = arith.constant dense<0.000000e+00> : vector<2xf32>
    %25 = vector.multi_reduction <add>, %24, %cst_13 [1] : vector<2x2xf32> to vector<2xf32>
    %26 = vector.shape_cast %25 : vector<2xf32> to vector<2x1xf32>
    %c2_i32 = arith.constant 2 : i32
    %27 = arith.muli %arg0, %c2_i32 : i32
    %28 = tpu.iota {dimensions = array<i32: 0>} : vector<2x1xi32>
    %29 = vector.broadcast %27 : i32 to vector<2x1xi32>
    %30 = arith.addi %29, %28 : vector<2x1xi32>
    %c2_i32_14 = arith.constant 2 : i32
    %31 = vector.broadcast %c2_i32_14 : i32 to vector<2x1xi32>
    %32 = arith.cmpi slt, %30, %31 : vector<2x1xi32>
    %33 = arith.subf %17, %26 : vector<2x1xf32>
    %cst_15 = arith.constant 0.000000e+00 : f32
    %34 = vector.broadcast %cst_15 : f32 to vector<2x1xf32>
    %35 = arith.select %32, %33, %34 : vector<2x1xi1>, vector<2x1xf32>
    %36 = vector.shape_cast %35 : vector<2x1xf32> to vector<1x2x1xf32>
    %cst_16 = arith.constant dense<0.000000e+00> : vector<1xf32>
    %37 = vector.multi_reduction <add>, %36, %cst_16 [1, 2] : vector<1x2x1xf32> to vector<1xf32>
    %38 = vector.shape_cast %37 : vector<1xf32> to vector<1x1x1xf32>
    %39 = vector.extract %38[0, 0, 0] : f32 from vector<1x1x1xf32>
    %40 = vector.broadcast %39 : f32 to vector<8x128xf32>
    %c0_17 = arith.constant 0 : index
    %c0_18 = arith.constant 0 : index
    %41 = vector.load %arg7[%c0_17, %c0_18] : memref<8x128xf32, #tpu.memory_space<vmem>>, vector<8x128xf32>
    tpu.vector_store %arg7[%c0_17, %c0_18], %40 {strides = array<i32>} : memref<8x128xf32, #tpu.memory_space<vmem>>, vector<8x128xf32>,
    return
  }
  func.func @transform_0(%arg0: i32) -> (i32, i32) {
    %c0_i32 = arith.constant 0 : i32
    %c0_i32_0 = arith.constant 0 : i32
    return %arg0, %c0_i32 : i32, i32
  }
  func.func @transform_1(%arg0: i32) -> (i32, i32) {
    %c0_i32 = arith.constant 0 : i32
    %c0_i32_0 = arith.constant 0 : i32
    return %arg0, %c0_i32 : i32, i32
  }
  func.func @transform_2(%arg0: i32) -> (i32, i32) {
    %c0_i32 = arith.constant 0 : i32
    %c0_i32_0 = arith.constant 0 : i32
    %c0_i32_1 = arith.constant 0 : i32
    return %c0_i32, %c0_i32_0 : i32, i32
  }
  func.func @transform_3(%arg0: i32) -> (i32, i32) {
    %c0_i32 = arith.constant 0 : i32
    %c0_i32_0 = arith.constant 0 : i32
    %c0_i32_1 = arith.constant 0 : i32
    return %c0_i32, %c0_i32_0 : i32, i32
  }
  func.func @transform_4(%arg0: i32) -> (i32, i32) {
    %c0_i32 = arith.constant 0 : i32
    %c0_i32_0 = arith.constant 0 : i32
    return %arg0, %c0_i32 : i32, i32
  }
  func.func @transform_5(%arg0: i32) -> (i32, i32) {
    %c0_i32 = arith.constant 0 : i32
    %c0_i32_0 = arith.constant 0 : i32
    return %arg0, %c0_i32 : i32, i32
  }
  func.func @transform_6(%arg0: i32) -> (i32, i32) {
    %c0_i32 = arith.constant 0 : i32
    %c0_i32_0 = arith.constant 0 : i32
    return %arg0, %c0_i32 : i32, i32
  }
}

</mosaic_0001>

<llo_original>
// kernel: tpu_custom_call.1
$region0: #{tpu_custom_call.1}
  #allocation0 [shape = 'u32[]', space=smem, size = 0x4, offset = 0x4, fixed_abs, tag = 'smem constant byte address 0x4 - core index']
  #allocation1 [shape = 'u32[144,128]{1,0:T(1,128)}', space=vmem, size = 0x12000, scoped, tag = 'internal scratch']
  %s0 = inlined_call_operand.vmem [shape: bf16[2,32], index: 0, kind: input, shape index: {}]
  %s1 = inlined_call_operand.vmem [shape: bf16[2,32], index: 1, kind: input, shape index: {}]
  %s2 = inlined_call_operand.vmem [shape: bf16[32,2], index: 2, kind: input, shape index: {}]
  %s3 = inlined_call_operand.vmem [shape: f32[1,2], index: 3, kind: input, shape index: {}]
  %s4 = inlined_call_operand.vmem [shape: s32[2,1], index: 4, kind: input, shape index: {}]
  %s5 = inlined_call_operand.hbm [shape: f32[2,2], index: 5, kind: output, shape index: {0}]
  %s6 = inlined_call_operand.hbm [shape: f32[8,128], index: 6, kind: output, shape index: {1}]
  %7 = xla_tuple %s5, %s6
  %s8 = sld [smem:[#allocation0]]
  $region38: #{tpu_custom_call.1} parent=0
    _
  %s10 = ssub.s32 1, %s8
  %s11 = scalar_select 0, %s10, %s8
  $region1: #{tpu_custom_call.1} parent=0
    #allocation2 [shape = 'u8[1024]{0}', space=vmem, size = 0x400, scoped, tag = 'output window, operand 0, single buffered']
    #allocation3 [shape = 's32[1]{0}', space=sflag, size = 0x4, scoped, tag = 'scoped memory for tpu_custom_call.1']
    #allocation4 [shape = 'u8[4096]{0}', space=vmem, size = 0x1000, scoped, tag = 'output window, operand 1, single buffered']
    #allocation5 [shape = 's32[1]{0}', space=sflag, size = 0x4, scoped, tag = 'scoped memory for tpu_custom_call.1']
    %12 = vsyncpa [#allocation3], 0
    %13 = vsyncpa [#allocation5], 0
    // Predicated region
    $region2: #{tpu_custom_call.1} parent=1 // pred_check
      _
    $region3: #{tpu_custom_call.1} parent=1 // pred_check_branch
      %15 = sbr.rel (0) target = $region5
    $region4: #{tpu_custom_call.1} parent=1 // pred_region
      _
    $region5: #{tpu_custom_call.1} parent=1 // pred_fallthru
      _
    // Predicated region
    $region6: #{tpu_custom_call.1} parent=1 // pred_check
      _
    $region7: #{tpu_custom_call.1} parent=1 // pred_check_branch
      %17 = sbr.rel (0) target = $region9
    $region8: #{tpu_custom_call.1} parent=1 // pred_region
      _
    $region9: #{tpu_custom_call.1} parent=1 // pred_fallthru
      _
    // Predicated region
    $region10: #{tpu_custom_call.1} parent=1 // pred_check
      _
    $region11: #{tpu_custom_call.1} parent=1 // pred_check_branch
      %19 = sbr.rel (0) target = $region13
    $region12: #{tpu_custom_call.1} parent=1 // pred_region
      _
    $region13: #{tpu_custom_call.1} parent=1 // pred_fallthru
      _
    // Predicated region
    $region14: #{tpu_custom_call.1} parent=1 // pred_check
      _
    $region15: #{tpu_custom_call.1} parent=1 // pred_check_branch
      %21 = sbr.rel (0) target = $region17
    $region16: #{tpu_custom_call.1} parent=1 // pred_region
      _
    $region17: #{tpu_custom_call.1} parent=1 // pred_fallthru
      _
    // Predicated region
    $region18: #{tpu_custom_call.1} parent=1 // pred_check
      _
    $region19: #{tpu_custom_call.1} parent=1 // pred_check_branch
      %23 = sbr.rel (0) target = $region21
    $region20: #{tpu_custom_call.1} parent=1 // pred_region
      _
    $region21: #{tpu_custom_call.1} parent=1 // pred_fallthru
      _
    %v25 = vld [vmem:[%s0] sm:$0x1]
    %v26 = vld [vmem:[%s1] sm:$0x1]
    %v27 = vadd.bf16 %v25, %v26
    %v28 = vld [vmem:[%s2] sm:$0xf]
    %v29 = vld [vmem:[%s2 + $0x4] sm:$0xf]
    %v30 = vld [vmem:[%s2 + $0x8] sm:$0xf]
    %v31 = vld [vmem:[%s2 + $0xc] sm:$0xf]
    %v32 = vld [vmem:[%s3] sm:$0x1]
    %v34 = vlaneseq
    %v35 = vshrl.u32 %v34, 7
    %v36 = vsub.s32 0, %v35
    %v37 = vrot.slane %v32, %v36
    %v43 = vunpack.c.l.b16 %v28
    %v44 = vunpack.c.l.b16 %v29
    %v45 = vunpack.c.l.b16 %v30
    %v46 = vunpack.c.l.b16 %v31
    %v47 = vpack.c.b16 %v44, %v43
    %v48 = vpack.c.b16 %v46, %v45
    %vm51 = vcmask 261120
    %v53 = vsel %vm51, %v27, 0
    %55 = vmatprep.subr.bf16.mxu0 0
    %56 = vmatpush1.bf16.msra.mxu0 %v47
    %57 = vmatprep.subr.bf16.mxu0 0
    %58 = vmatpush1.bf16.msra.mxu0 %v48
    %59 = vmatprep.subr.bf16.mxu0 0
    %60 = vmatpush1.bf16.msra.mxu0 0
    %61 = vmatprep.subr.bf16.mxu0 0
    %62 = vmatpush1.bf16.msra.mxu0 0
    %63 = vmatprep.subr.bf16.mxu0 0
    %64 = vmatpush1.bf16.msra.mxu0 0
    %65 = vmatprep.subr.bf16.mxu0 0
    %66 = vmatpush1.bf16.msra.mxu0 0
    %67 = vmatprep.subr.bf16.mxu0 0
    %68 = vmatpush1.bf16.msra.mxu0 0
    %69 = vmatprep.subr.bf16.mxu0 0
    %70 = vmatpush1.bf16.msra.mxu0 0
    %71 = vmatprep.subr.bf16.mxu0 0
    %72 = vmatpush1.bf16.msra.mxu0 0
    %73 = vmatprep.subr.bf16.mxu0 0
    %74 = vmatpush1.bf16.msra.mxu0 0
    %75 = vmatprep.subr.bf16.mxu0 0
    %76 = vmatpush1.bf16.msra.mxu0 0
    %77 = vmatprep.subr.bf16.mxu0 0
    %78 = vmatpush1.bf16.msra.mxu0 0
    %79 = vmatprep.subr.bf16.mxu0 0
    %80 = vmatpush1.bf16.msra.mxu0 0
    %81 = vmatprep.subr.bf16.mxu0 0
    %82 = vmatpush1.bf16.msra.mxu0 0
    %83 = vmatprep.subr.bf16.mxu0 0
    %84 = vmatpush1.bf16.msra.mxu0 0
    %85 = vmatprep.subr.bf16.mxu0 0
    %86 = vmatpush1.bf16.msra.mxu0 0
    %87 = vmatprep.mubr.bf16.mxu0 0
    %88 = vmatmul.mubr.bf16.gmra.mrb[0].mxu0 %v53
    %v89 = vpop.f32.mrb[0].mxu0
    %v90 = vadd.f32 %v37, %v89
    %v91 = vpop.f32.mrb[0].mxu0
    %v92 = vpop.f32.mrb[0].mxu0
    %v93 = vpop.f32.mrb[0].mxu0
    %94 = vdwg.mxu0
    %vm95 = vcmask 9216
    %96 = vst.msk [vmem:[#allocation2] sm:$0x3] %vm95, %v90
    %v97 = vsel %vm95, %v90, -inf
    %98 = vmax.xlane.f32.xlu0 %v97
    %v99 = vpop.xlane.xlu0 %98
    %v100 = vsub.f32 %v90, %v99
    %v101 = vmul.f32 %v100, 1.442695
    %v102 = vpow.pop %v101
    %v103 = vsel %vm95, %v102, 0.0
    %104 = vadd.xlane.f32.xlu0 %v103
    %v105 = vpop.xlane.xlu0 %104
    %v106 = vlog2.pop %v105
    %v107 = vmul.f32 %v106, 0.6931472
    %v108 = vadd.f32 %v99, %v107
    %v109 = vlaneseq
    %v110 = vand.u32 %v109, 127
    %v111 = vld [vmem:[%s4] sm:$0x3]
    %112 = vset.pattern.permute.xlu0 0
    %113 = vperm.xlu0 %112, %v111
    %v114 = vpop.permute.xlu0 %113
    %vm115 = vcmp.eq.s32.totalorder %v110, %v114
    %v116 = vsel %vm115, 1, 0
    %v117 = vcvt.s32.f32 %v116
    %v118 = vmul.f32 %v90, %v117
    %v119 = vsel %vm95, %v118, 0.0
    %120 = vadd.xlane.f32.xlu0 %v119
    %v121 = vpop.xlane.xlu0 %120
    %s122 = smul.u32 0, 2
    %v123 = vlaneseq
    %v124 = vshrl.u32 %v123, 7
    %v125 = vstv %s122
    %v126 = vadd.s32 %v125, %v124
    %vm127 = vcmp.lt.s32.totalorder %v126, 2
    %v128 = vsub.f32 %v108, %v121
    %v129 = vsel %vm127, %v128, 0.0
    %vm130 = vcmask 1024
    %v131 = vsel %vm130, %v129, 0.0
    %132 = vadd.xlane.f32.xlu0 %v131
    %v133 = vpop.xlane.xlu0 %132
    %v134 = vrot.slane %v133, 4
    %v135 = vadd.f32 %v133, %v134
    %v136 = vrot.slane %v135, 2
    %v137 = vadd.f32 %v135, %v136
    %v138 = vrot.slane %v137, 1
    %v139 = vadd.f32 %v137, %v138
    %s140 = vtos %v139
    %v141 = vstv %s140
    %142 = vst [vmem:[#allocation4] sm:$0xff] %v141
    // Predicated region
    $region22: #{tpu_custom_call.1} parent=1 // pred_check
      _
    $region23: #{tpu_custom_call.1} parent=1 // pred_check_branch
      %144 = sbr.rel (0) target = $region25
    $region24: #{tpu_custom_call.1} parent=1 // pred_region
      %s146 = ssub.s32 32, 32
      %147 = vsyncadd [#allocation3], %s146
      %s149 = sshll.u32 [#allocation2], 4
      %s150 = int_to_ptr.vmem [resolvable:$true] %s149
      %152 = dma.vmem_to_hbm [thread:$0]  %s150, 32, %s5, [#allocation3]
    $region25: #{tpu_custom_call.1} parent=1 // pred_fallthru
      _
    // Predicated region
    $region26: #{tpu_custom_call.1} parent=1 // pred_check
      _
    $region27: #{tpu_custom_call.1} parent=1 // pred_check_branch
      %154 = sbr.rel (0) target = $region29
    $region28: #{tpu_custom_call.1} parent=1 // pred_region
      %s156 = ssub.s32 128, 128
      %157 = vsyncadd [#allocation5], %s156
      %s159 = sshll.u32 [#allocation4], 4
      %s160 = int_to_ptr.vmem [resolvable:$true] %s159
      %162 = dma.vmem_to_hbm [thread:$0]  %s160, 128, %s6, [#allocation5]
    $region29: #{tpu_custom_call.1} parent=1 // pred_fallthru
      _
    // Predicated region
    $region30: #{tpu_custom_call.1} parent=1 // pred_check
      _
    $region31: #{tpu_custom_call.1} parent=1 // pred_check_branch
      %164 = sbr.rel (0) target = $region33
    $region32: #{tpu_custom_call.1} parent=1 // pred_region
      %165 = dma.done [#allocation3], 32
    $region33: #{tpu_custom_call.1} parent=1 // pred_fallthru
      _
    // Predicated region
    $region34: #{tpu_custom_call.1} parent=1 // pred_check
      _
    $region35: #{tpu_custom_call.1} parent=1 // pred_check_branch
      %167 = sbr.rel (0) target = $region37
    $region36: #{tpu_custom_call.1} parent=1 // pred_region
      %168 = dma.done [#allocation5], 128
    $region37: #{tpu_custom_call.1} parent=1 // pred_fallthru
      _
    %169 = vsyncpa [#allocation3], 1
    %170 = vsyncpa [#allocation5], 1

</llo_original>
